<compile_context>
chip_gen: v6e
topology: v6e:2x2x1
jax: 0.10.0
libtpu: 0.0.40
codegen_flags: <defaults>
</compile_context>

<pallas_src>
import jax
import jax.numpy as jnp
from jax.experimental import pallas as pl
from jax.experimental.pallas import tpu as pltpu

EMB_DIM = 300
HIDDEN = 128


def scorer_kernel(x_ref, w1_ref, b1_ref, w2_ref, b2_ref, o_ref):
    # x_ref:  (TB, E)  f32  (streamed; cast to bf16 here -> no extra HBM pass)
    # w1_ref: (E, H)   bf16 (resident)
    # b1_ref: (1, H)   f32  (resident)
    # w2_ref: (1, H)   f32  (resident; layer-2 weights as a row)
    # b2_ref: (1, 1)   f32  (SMEM scalar)
    # o_ref:  (1, TB)  f32  (lane-dense output row for this batch tile)

    # Layer 1 on the MXU with bf16 operands, f32 accumulation.
    x_bf = x_ref[...].astype(jnp.bfloat16)
    h = jnp.dot(x_bf, w1_ref[...], preferred_element_type=jnp.float32)  # (TB, H)
    # Bias + ReLU on the VPU in f32 (v5e has no bf16 VPU path).
    h = jnp.maximum(h + b1_ref[...], 0.0)

    # Layer 2 (H -> 1) as a (1, H) x (TB, H)^T matmul -> (1, TB) lane-dense
    # directly off the MXU: no sublane->lane relayout, no masked stores.
    y = jax.lax.dot_general(
        w2_ref[...], h,
        dimension_numbers=(((1,), (1,)), ((), ())),
        preferred_element_type=jnp.float32)                             # (1, TB)
    o_ref[...] = (y + b2_ref[0, 0]).astype(o_ref.dtype)


def _round_up(n, m):
    return ((n + m - 1) // m) * m


def scorer_forward(x, w1, b1, w2, b2, *, block_b=4096):
    """y = relu(x @ w1 + b1) @ w2 + b2 computed in one Pallas kernel.

    x: (B, EMB_DIM); w1: (EMB_DIM, H); b1: (H,); w2: (H, 1); b2: (1,)
    Returns (B, 1) float32.
    """
    B, E = x.shape
    assert E == w1.shape[0]
    H = w1.shape[1]

    # Batch tile:
    #  * multiple of 128 -> full-lane unmasked output vst + MXU-aligned M
    #  * capped at round_up(cdiv(B,2),128) so moderate batches give >= 2 grid
    #    tiles (keeps both v7x TensorCores busy)
    #  * default cap 4096 keeps f32-streamed, double-buffered x (~13 MiB) under
    #    the 32 MiB vmem limit set below (v5e scoped default is only 16 MiB).
    eff = max(128, min(block_b, _round_up(pl.cdiv(B, 2), 128)))
    num_tiles = pl.cdiv(B, eff)

    # Stream x as f32; cast to bf16 inside the kernel (saves a full HBM
    # read+write vs a wrapper-side astype). No jnp.pad: the trailing partial
    # block is handled by Pallas and OOB rows are discarded by [:B].
    x_f32 = x.astype(jnp.float32)
    # Small per-call casts/reshapes of the weights; for repeated calls these
    # should be hoisted/cached by the caller.
    w1_bf = w1.astype(jnp.bfloat16)
    b1_2d = b1.reshape(1, H).astype(jnp.float32)
    w2_row = w2.reshape(1, H).astype(jnp.float32)   # (H,1) -> (1,H) row
    b2_2d = b2.reshape(1, 1).astype(jnp.float32)

    cost = pl.CostEstimate(
        flops=2 * B * E * H + 2 * B * H,
        transcendentals=0,
        bytes_accessed=B * E * 4 + B * 4 + E * H * 2 + 2 * H * 4 + 4,
    )

    out = pl.pallas_call(
        scorer_kernel,
        out_shape=jax.ShapeDtypeStruct((num_tiles, eff), jnp.float32),  # lane-dense
        grid_spec=pltpu.PrefetchScalarGridSpec(
            num_scalar_prefetch=0,
            grid=(num_tiles,),
            in_specs=[
                pl.BlockSpec((eff, E), lambda i: (i, 0)),            # x tile (streamed)
                pl.BlockSpec((E, H), lambda i: (0, 0)),              # w1 (resident)
                pl.BlockSpec((1, H), lambda i: (0, 0)),              # b1 (resident)
                pl.BlockSpec((1, H), lambda i: (0, 0)),              # w2 row (resident)
                pl.BlockSpec(memory_space=pltpu.MemorySpace.SMEM),   # b2 scalar
            ],
            out_specs=pl.BlockSpec((1, eff), lambda i: (i, 0)),
        ),
        compiler_params=pltpu.CompilerParams(
            dimension_semantics=("parallel",),
            vmem_limit_bytes=32 * 1024 * 1024,
        ),
        cost_estimate=cost,
    )(x_f32, w1_bf, b1_2d, w2_row, b2_2d)

    # Tile t, lane j  <->  batch row t*eff + j  ->  row-major reshape is correct;
    # OOB rows of the trailing partial tile are sliced away here.
    return out.reshape(num_tiles * eff, 1)[:B]


def init_params(key, emb_dim=EMB_DIM, hidden=HIDDEN, dtype=jnp.float32):
    # Deterministic synthetic init (uniform, roughly nn.Linear's default scale).
    k1, k2, k3, k4 = jax.random.split(key, 4)
    lim1 = 1.0 / (emb_dim ** 0.5)
    lim2 = 1.0 / (hidden ** 0.5)
    w1 = jax.random.uniform(k1, (emb_dim, hidden), dtype, -lim1, lim1)
    b1 = jax.random.uniform(k2, (hidden,), dtype, -lim1, lim1)
    w2 = jax.random.uniform(k3, (hidden, 1), dtype, -lim2, lim2)
    b2 = jax.random.uniform(k4, (1,), dtype, -lim2, lim2)
    return w1, b1, w2, b2


if __name__ == "__main__":
    key = jax.random.PRNGKey(0)
    kx, kp = jax.random.split(key)
    w1, b1, w2, b2 = init_params(kp)

    def reference_bf16(x):
        # Mirrors kernel numerics: bf16 MXU inputs, f32 accumulation, f32 layer 2.
        h = jnp.dot(x.astype(jnp.bfloat16), w1.astype(jnp.bfloat16),
                    preferred_element_type=jnp.float32)
        h = jnp.maximum(h + b1, 0.0)
        return jnp.dot(h, w2, precision=jax.lax.Precision.HIGHEST) + b2

    def reference_f32(x):
        h = jnp.maximum(jnp.dot(x, w1, precision=jax.lax.Precision.HIGHEST) + b1, 0.0)
        return jnp.dot(h, w2, precision=jax.lax.Precision.HIGHEST) + b2

    # Small ragged batch (single partial tile: B=10 < eff=128).
    x_small = jax.random.normal(kx, (10, EMB_DIM), jnp.float32)
    out_small = jax.block_until_ready(scorer_forward(x_small, w1, b1, w2, b2))
    assert out_small.shape == (10, 1)
    assert jnp.allclose(out_small, reference_bf16(x_small), atol=1e-3, rtol=1e-3)
    assert jnp.allclose(out_small, reference_f32(x_small), atol=5e-2, rtol=5e-2)

    # Multi-tile path: block_b=128 -> 3 grid steps over 300 rows, trailing
    # partial tile (44 rows) exercised with no wrapper-side padding.
    x_big = jax.random.normal(kx, (300, EMB_DIM), jnp.float32)
    out_big = jax.block_until_ready(scorer_forward(x_big, w1, b1, w2, b2, block_b=128))
    assert out_big.shape == (300, 1)
    assert jnp.allclose(out_big, reference_bf16(x_big), atol=1e-3, rtol=1e-3)
    assert jnp.allclose(out_big, reference_f32(x_big), atol=5e-2, rtol=5e-2)

    # Default tile sizing path (eff = round_up(cdiv(300,2),128) = 256 -> 2 tiles).
    out_def = jax.block_until_ready(scorer_forward(x_big, w1, b1, w2, b2))
    assert out_def.shape == (300, 1)
    assert jnp.allclose(out_def, reference_bf16(x_big), atol=1e-3, rtol=1e-3)

    print("KERNEL_OK")
</pallas_src>

<mosaic_0001>
module attributes {stable_mosaic.version = 11 : i64} {
  func.func @scorer_kernel(%arg0: i32, %arg1: memref<128x300xf32, #tpu.memory_space<vmem>>, %arg2: memref<300x128xbf16, #tpu.memory_space<vmem>>, %arg3: memref<1x128xf32, #tpu.memory_space<vmem>>, %arg4: memref<1x128xf32, #tpu.memory_space<vmem>>, %arg5: memref<1x1xf32, #tpu.memory_space<smem>>, %arg6: memref<1x128xf32, #tpu.memory_space<vmem>>) attributes {dimension_semantics = [#tpu.dimension_semantics<parallel>], iteration_bounds = array<i64: 1>, scalar_prefetch = 0 : i64, scratch_operands = 0 : i64, tpu.core_type = #tpu.core_type<tc>, window_params = [{transform_indices = @transform_0, window_bounds = array<i64: 128, 300>}, {pipeline_mode = #tpu.pipeline_mode<synchronous>, transform_indices = @transform_1, window_bounds = array<i64: 300, 128>}, {pipeline_mode = #tpu.pipeline_mode<synchronous>, transform_indices = @transform_2, window_bounds = array<i64: 1, 128>}, {pipeline_mode = #tpu.pipeline_mode<synchronous>, transform_indices = @transform_3, window_bounds = array<i64: 1, 128>}, {transform_indices = @transform_4, window_bounds = array<i64: 1, 1>}, {transform_indices = @transform_5, window_bounds = array<i64: 1, 128>}]} {
    %c0 = arith.constant 0 : index
    %c0_0 = arith.constant 0 : index
    %0 = vector.load %arg1[%c0, %c0_0] : memref<128x300xf32, #tpu.memory_space<vmem>>, vector<128x300xf32>
    %1 = arith.truncf %0 : vector<128x300xf32> to vector<128x300xbf16>
    %c0_1 = arith.constant 0 : index
    %c0_2 = arith.constant 0 : index
    %2 = vector.load %arg2[%c0_1, %c0_2] : memref<300x128xbf16, #tpu.memory_space<vmem>>, vector<300x128xbf16>
    %cst = arith.constant dense<0.000000e+00> : vector<128x128xf32>
    %3 = tpu.matmul %1, %2, %cst {dimension_numbers = #tpu.dot_dimension_numbers<[1], [0], [0], [1], [0, 0, 1, 1], [], []>} : vector<128x300xbf16>, vector<300x128xbf16>, vector<128x128xf32> -> vector<128x128xf32>
    %c0_3 = arith.constant 0 : index
    %c0_4 = arith.constant 0 : index
    %4 = vector.load %arg3[%c0_3, %c0_4] : memref<1x128xf32, #tpu.memory_space<vmem>>, vector<1x128xf32>
    %5 = vector.broadcast %4 : vector<1x128xf32> to vector<128x128xf32>
    %6 = arith.addf %3, %5 : vector<128x128xf32>
    %cst_5 = arith.constant 0.000000e+00 : f32
    %7 = vector.broadcast %cst_5 : f32 to vector<128x128xf32>
    %8 = arith.maximumf %6, %7 : vector<128x128xf32>
    %c0_6 = arith.constant 0 : index
    %c0_7 = arith.constant 0 : index
    %9 = vector.load %arg4[%c0_6, %c0_7] : memref<1x128xf32, #tpu.memory_space<vmem>>, vector<1x128xf32>
    %cst_8 = arith.constant dense<0.000000e+00> : vector<1x128xf32>
    %10 = tpu.matmul %9, %8, %cst_8 {dimension_numbers = #tpu.dot_dimension_numbers<[1], [1], [0], [0], [0, 0, 1, 0], [], []>} : vector<1x128xf32>, vector<128x128xf32>, vector<1x128xf32> -> vector<1x128xf32>
    %c0_9 = arith.constant 0 : index
    %c0_10 = arith.constant 0 : index
    %11 = memref.load %arg5[%c0_9, %c0_10] : memref<1x1xf32, #tpu.memory_space<smem>>
    %12 = vector.broadcast %11 : f32 to vector<1x128xf32>
    %13 = arith.addf %10, %12 : vector<1x128xf32>
    %c0_11 = arith.constant 0 : index
    %c0_12 = arith.constant 0 : index
    %14 = vector.load %arg6[%c0_11, %c0_12] : memref<1x128xf32, #tpu.memory_space<vmem>>, vector<1x128xf32>
    tpu.vector_store %arg6[%c0_11, %c0_12], %13 {strides = array<i32>} : memref<1x128xf32, #tpu.memory_space<vmem>>, vector<1x128xf32>,
    return
  }
  func.func @transform_0(%arg0: i32) -> (i32, i32) {
    %c0_i32 = arith.constant 0 : i32
    %c0_i32_0 = arith.constant 0 : i32
    return %arg0, %c0_i32 : i32, i32
  }
  func.func @transform_1(%arg0: i32) -> (i32, i32) {
    %c0_i32 = arith.constant 0 : i32
    %c0_i32_0 = arith.constant 0 : i32
    %c0_i32_1 = arith.constant 0 : i32
    return %c0_i32, %c0_i32_0 : i32, i32
  }
  func.func @transform_2(%arg0: i32) -> (i32, i32) {
    %c0_i32 = arith.constant 0 : i32
    %c0_i32_0 = arith.constant 0 : i32
    %c0_i32_1 = arith.constant 0 : i32
    return %c0_i32, %c0_i32_0 : i32, i32
  }
  func.func @transform_3(%arg0: i32) -> (i32, i32) {
    %c0_i32 = arith.constant 0 : i32
    %c0_i32_0 = arith.constant 0 : i32
    %c0_i32_1 = arith.constant 0 : i32
    return %c0_i32, %c0_i32_0 : i32, i32
  }
  func.func @transform_4(%arg0: i32) -> (i32, i32) {
    %c0_i32 = arith.constant 0 : i32
    %c0_i32_0 = arith.constant 0 : i32
    %c0_i32_1 = arith.constant 0 : i32
    return %c0_i32, %c0_i32_0 : i32, i32
  }
  func.func @transform_5(%arg0: i32) -> (i32, i32) {
    %c0_i32 = arith.constant 0 : i32
    %c0_i32_0 = arith.constant 0 : i32
    return %arg0, %c0_i32 : i32, i32
  }
}

</mosaic_0001>

<llo_original>
// kernel: tpu_custom_call.1
$region0: #{tpu_custom_call.1}
  #allocation0 [shape = 'u32[]', space=smem, size = 0x4, offset = 0x4, fixed_abs, tag = 'smem constant byte address 0x4 - core index']
  #allocation1 [shape = 'u32[144,128]{1,0:T(1,128)}', space=vmem, size = 0x12000, scoped, tag = 'internal scratch']
  #allocation2 [shape = 'f32[1,1]{1,0:T(1,128)S(6)}', space=smem, size = 0x200, scoped, tag = 'scoped memory for tpu_custom_call.1']
  %s0 = inlined_call_operand.hbm [shape: f32[10,300], index: 0, kind: input, shape index: {}]
  %s1 = inlined_call_operand.hbm [shape: bf16[300,128], index: 1, kind: input, shape index: {}]
  %s2 = inlined_call_operand.vmem [shape: f32[1,128], index: 2, kind: input, shape index: {}]
  %s3 = inlined_call_operand.vmem [shape: f32[1,128], index: 3, kind: input, shape index: {}]
  %s4 = inlined_call_operand.<no memory space> [shape: f32[1,1], index: 4, kind: input, shape index: {}]
  %s5 = inlined_call_operand.hbm [shape: f32[1,128], index: 5, kind: output, shape index: {}]
  %s6 = sld [smem:[#allocation0]]
  $region38: #{tpu_custom_call.1} parent=0
    _
  %s8 = ssub.s32 1, %s6
  %s9 = scalar_select 0, %s8, %s6
  %10 = sst [smem:[#allocation2]] %s4
  $region1: #{tpu_custom_call.1} parent=0
    #allocation3 [shape = 'u8[196608]{0}', space=vmem, size = 0x30000, scoped, tag = 'input window, operand 0, single buffered']
    #allocation4 [shape = 's32[1]{0}', space=sflag, size = 0x4, scoped, tag = 'scoped memory for tpu_custom_call.1']
    #allocation5 [shape = 's32[1]{0}', space=sflag, size = 0x4, scoped, tag = 'scoped memory for tpu_custom_call.1']
    #allocation6 [shape = 'u8[77824]{0}', space=vmem, size = 0x13000, scoped, tag = 'input window, operand 1, single buffered']
    #allocation7 [shape = 's32[1]{0}', space=sflag, size = 0x4, scoped, tag = 'scoped memory for tpu_custom_call.1']
    #allocation8 [shape = 'u8[512]{0}', space=vmem, size = 0x400, scoped, tag = 'output window, operand 0, single buffered']
    %11 = vsyncpa [#allocation4], 0
    %12 = vsyncpa [#allocation7], 0
    %13 = vsyncpa [#allocation5], 0
    // Predicated region
    $region2: #{tpu_custom_call.1} parent=1 // pred_check
      _
    $region3: #{tpu_custom_call.1} parent=1 // pred_check_branch
      %15 = sbr.rel (0) target = $region5
    $region4: #{tpu_custom_call.1} parent=1 // pred_region
      %s17 = ssub.s32 6144, 768
      %18 = vsyncadd [#allocation4], %s17
      %s19 = sshll.u32 [#allocation3], 4
      %s20 = int_to_ptr.vmem [resolvable:$true] %s19
      %25 = dma.hbm_to_vmem [thread:$0]  %s0, 768, %s20, [#allocation4], 384, 384, 24
    $region5: #{tpu_custom_call.1} parent=1 // pred_fallthru
      _
    // Predicated region
    $region6: #{tpu_custom_call.1} parent=1 // pred_check
      _
    $region7: #{tpu_custom_call.1} parent=1 // pred_check_branch
      %27 = sbr.rel (0) target = $region9
    $region8: #{tpu_custom_call.1} parent=1 // pred_region
      %s29 = ssub.s32 2432, 2432
      %30 = vsyncadd [#allocation7], %s29
      %s31 = sshll.u32 [#allocation6], 4
      %s32 = int_to_ptr.vmem [resolvable:$true] %s31
      %37 = dma.hbm_to_vmem [thread:$0]  %s1, 2432, %s32, [#allocation7], 64, 64, 4
    $region9: #{tpu_custom_call.1} parent=1 // pred_fallthru
      _
    // Predicated region
    $region10: #{tpu_custom_call.1} parent=1 // pred_check
      _
    $region11: #{tpu_custom_call.1} parent=1 // pred_check_branch
      %39 = sbr.rel (0) target = $region13
    $region12: #{tpu_custom_call.1} parent=1 // pred_region
      _
    $region13: #{tpu_custom_call.1} parent=1 // pred_fallthru
      _
    // Predicated region
    $region14: #{tpu_custom_call.1} parent=1 // pred_check
      _
    $region15: #{tpu_custom_call.1} parent=1 // pred_check_branch
      %41 = sbr.rel (0) target = $region17
    $region16: #{tpu_custom_call.1} parent=1 // pred_region
      _
    $region17: #{tpu_custom_call.1} parent=1 // pred_fallthru
      _
    // Predicated region
    $region18: #{tpu_custom_call.1} parent=1 // pred_check
      _
    $region19: #{tpu_custom_call.1} parent=1 // pred_check_branch
      %43 = sbr.rel (0) target = $region21
    $region20: #{tpu_custom_call.1} parent=1 // pred_region
      _
    $region21: #{tpu_custom_call.1} parent=1 // pred_fallthru
      _
    // Predicated region
    $region22: #{tpu_custom_call.1} parent=1 // pred_check
      _
    $region23: #{tpu_custom_call.1} parent=1 // pred_check_branch
      %45 = sbr.rel (0) target = $region25
    $region24: #{tpu_custom_call.1} parent=1 // pred_region
      %46 = dma.done [#allocation4], 6144
    $region25: #{tpu_custom_call.1} parent=1 // pred_fallthru
      _
    // Predicated region
    $region26: #{tpu_custom_call.1} parent=1 // pred_check
      _
    $region27: #{tpu_custom_call.1} parent=1 // pred_check_branch
      %48 = sbr.rel (0) target = $region29
    $region28: #{tpu_custom_call.1} parent=1 // pred_region
      %49 = dma.done [#allocation7], 2432
    $region29: #{tpu_custom_call.1} parent=1 // pred_fallthru
      _
    %v51 = vld [vmem:[#allocation3] sm:$0xff]
    %v52 = vld [vmem:[#allocation3 + $0x8] sm:$0xff]
    %v53 = vld [vmem:[#allocation3 + $0x10] sm:$0xff]
    %v54 = vld [vmem:[#allocation3 + $0x18] sm:$0xff]
    %v55 = vld [vmem:[#allocation3 + $0x20] sm:$0xff]
    %v56 = vld [vmem:[#allocation3 + $0x28] sm:$0xff]
    %v57 = vld [vmem:[#allocation3 + $0x30] sm:$0xff]
    %v58 = vld [vmem:[#allocation3 + $0x38] sm:$0xff]
    %v59 = vld [vmem:[#allocation3 + $0x40] sm:$0xff]
    %v60 = vld [vmem:[#allocation3 + $0x48] sm:$0xff]
    %v61 = vld [vmem:[#allocation3 + $0x50] sm:$0xff]
    %v62 = vld [vmem:[#allocation3 + $0x58] sm:$0xff]
    %v63 = vld [vmem:[#allocation3 + $0x60] sm:$0xff]
    %v64 = vld [vmem:[#allocation3 + $0x68] sm:$0xff]
    %v65 = vld [vmem:[#allocation3 + $0x70] sm:$0xff]
    %v66 = vld [vmem:[#allocation3 + $0x78] sm:$0xff]
    %v67 = vld [vmem:[#allocation3 + $0x80] sm:$0xff]
    %v68 = vld [vmem:[#allocation3 + $0x88] sm:$0xff]
    %v69 = vld [vmem:[#allocation3 + $0x90] sm:$0xff]
    %v70 = vld [vmem:[#allocation3 + $0x98] sm:$0xff]
    %v71 = vld [vmem:[#allocation3 + $0xa0] sm:$0xff]
    %v72 = vld [vmem:[#allocation3 + $0xa8] sm:$0xff]
    %v73 = vld [vmem:[#allocation3 + $0xb0] sm:$0xff]
    %v74 = vld [vmem:[#allocation3 + $0xb8] sm:$0xff]
    %v75 = vld [vmem:[#allocation3 + $0xc0] sm:$0xff]
    %v76 = vld [vmem:[#allocation3 + $0xc8] sm:$0xff]
    %v77 = vld [vmem:[#allocation3 + $0xd0] sm:$0xff]
    %v78 = vld [vmem:[#allocation3 + $0xd8] sm:$0xff]
    %v79 = vld [vmem:[#allocation3 + $0xe0] sm:$0xff]
    %v80 = vld [vmem:[#allocation3 + $0xe8] sm:$0xff]
    %v81 = vld [vmem:[#allocation3 + $0xf0] sm:$0xff]
    %v82 = vld [vmem:[#allocation3 + $0xf8] sm:$0xff]
    %v83 = vld [vmem:[#allocation3 + $0x100] sm:$0xff]
    %v84 = vld [vmem:[#allocation3 + $0x108] sm:$0xff]
    %v85 = vld [vmem:[#allocation3 + $0x110] sm:$0xff]
    %v86 = vld [vmem:[#allocation3 + $0x118] sm:$0xff]
    %v87 = vld [vmem:[#allocation3 + $0x120] sm:$0xff]
    %v88 = vld [vmem:[#allocation3 + $0x128] sm:$0xff]
    %v89 = vld [vmem:[#allocation3 + $0x130] sm:$0xff]
    %v90 = vld [vmem:[#allocation3 + $0x138] sm:$0xff]
    %v91 = vld [vmem:[#allocation3 + $0x140] sm:$0xff]
    %v92 = vld [vmem:[#allocation3 + $0x148] sm:$0xff]
    %v93 = vld [vmem:[#allocation3 + $0x150] sm:$0xff]
    %v94 = vld [vmem:[#allocation3 + $0x158] sm:$0xff]
    %v95 = vld [vmem:[#allocation3 + $0x160] sm:$0xff]
    %v96 = vld [vmem:[#allocation3 + $0x168] sm:$0xff]
    %v97 = vld [vmem:[#allocation3 + $0x170] sm:$0xff]
    %v98 = vld [vmem:[#allocation3 + $0x178] sm:$0xff]
    %v99 = vpack.c.bf16 %v54, %v51
    %v100 = vpack.c.bf16 %v55, %v52
    %v101 = vpack.c.bf16 %v56, %v53
    %v102 = vpack.c.bf16 %v60, %v57
    %v103 = vpack.c.bf16 %v61, %v58
    %v104 = vpack.c.bf16 %v62, %v59
    %v105 = vpack.c.bf16 %v66, %v63
    %v106 = vpack.c.bf16 %v67, %v64
    %v107 = vpack.c.bf16 %v68, %v65
    %v108 = vpack.c.bf16 %v72, %v69
    %v109 = vpack.c.bf16 %v73, %v70
    %v110 = vpack.c.bf16 %v74, %v71
    %v111 = vpack.c.bf16 %v78, %v75
    %v112 = vpack.c.bf16 %v79, %v76
    %v113 = vpack.c.bf16 %v80, %v77
    %v114 = vpack.c.bf16 %v84, %v81
    %v115 = vpack.c.bf16 %v85, %v82
    %v116 = vpack.c.bf16 %v86, %v83
    %v117 = vpack.c.bf16 %v90, %v87
    %v118 = vpack.c.bf16 %v91, %v88
    %v119 = vpack.c.bf16 %v92, %v89
    %v120 = vpack.c.bf16 %v96, %v93
    %v121 = vpack.c.bf16 %v97, %v94
    %v122 = vpack.c.bf16 %v98, %v95
    %v123 = vld [vmem:[#allocation6] sm:$0xf]
    %v124 = vld [vmem:[#allocation6 + $0x4] sm:$0xf]
    %v125 = vld [vmem:[#allocation6 + $0x8] sm:$0xf]
    %v126 = vld [vmem:[#allocation6 + $0xc] sm:$0xf]
    %v127 = vld [vmem:[#allocation6 + $0x10] sm:$0xf]
    %v128 = vld [vmem:[#allocation6 + $0x14] sm:$0xf]
    %v129 = vld [vmem:[#allocation6 + $0x18] sm:$0xf]
    %v130 = vld [vmem:[#allocation6 + $0x1c] sm:$0xf]
    %v131 = vld [vmem:[#allocation6 + $0x20] sm:$0xf]
    %v132 = vld [vmem:[#allocation6 + $0x24] sm:$0xf]
    %v133 = vld [vmem:[#allocation6 + $0x28] sm:$0xf]
    %v134 = vld [vmem:[#allocation6 + $0x2c] sm:$0xf]
    %v135 = vld [vmem:[#allocation6 + $0x30] sm:$0xf]
    %v136 = vld [vmem:[#allocation6 + $0x34] sm:$0xf]
    %v137 = vld [vmem:[#allocation6 + $0x38] sm:$0xf]
    %v138 = vld [vmem:[#allocation6 + $0x3c] sm:$0xf]
    %v139 = vld [vmem:[#allocation6 + $0x40] sm:$0xf]
    %v140 = vld [vmem:[#allocation6 + $0x44] sm:$0xf]
    %v141 = vld [vmem:[#allocation6 + $0x48] sm:$0xf]
    %v142 = vld [vmem:[#allocation6 + $0x4c] sm:$0xf]
    %v143 = vld [vmem:[#allocation6 + $0x50] sm:$0xf]
    %v144 = vld [vmem:[#allocation6 + $0x54] sm:$0xf]
    %v145 = vld [vmem:[#allocation6 + $0x58] sm:$0xf]
    %v146 = vld [vmem:[#allocation6 + $0x5c] sm:$0xf]
    %v147 = vld [vmem:[#allocation6 + $0x60] sm:$0xf]
    %v148 = vld [vmem:[#allocation6 + $0x64] sm:$0xf]
    %v149 = vld [vmem:[#allocation6 + $0x68] sm:$0xf]
    %v150 = vld [vmem:[#allocation6 + $0x6c] sm:$0xf]
    %v151 = vld [vmem:[#allocation6 + $0x70] sm:$0xf]
    %v152 = vld [vmem:[#allocation6 + $0x74] sm:$0xf]
    %v153 = vld [vmem:[#allocation6 + $0x78] sm:$0xf]
    %v154 = vld [vmem:[#allocation6 + $0x7c] sm:$0xf]
    %v155 = vld [vmem:[#allocation6 + $0x80] sm:$0xf]
    %v156 = vld [vmem:[#allocation6 + $0x84] sm:$0xf]
    %v157 = vld [vmem:[#allocation6 + $0x88] sm:$0xf]
    %v158 = vld [vmem:[#allocation6 + $0x8c] sm:$0xf]
    %v159 = vld [vmem:[#allocation6 + $0x90] sm:$0xf]
    %v160 = vld [vmem:[#allocation6 + $0x94] sm:$0x3]
    %v161 = vld [vmem:[%s2] sm:$0x1]
    %v163 = vlaneseq
    %v164 = vshrl.u32 %v163, 7
    %v165 = vsub.s32 0, %v164
    %v166 = vrot.slane %v161, %v165
    %v206 = vunpack.c.l.b16 %v123
    %v207 = vunpack.c.l.b16 %v124
    %v208 = vunpack.c.l.b16 %v125
    %v209 = vunpack.c.l.b16 %v126
    %v210 = vunpack.c.l.b16 %v127
    %v211 = vunpack.c.l.b16 %v128
    %v212 = vunpack.c.l.b16 %v129
    %v213 = vunpack.c.l.b16 %v130
    %v214 = vunpack.c.l.b16 %v131
    %v215 = vunpack.c.l.b16 %v132
    %v216 = vunpack.c.l.b16 %v133
    %v217 = vunpack.c.l.b16 %v134
    %v218 = vunpack.c.l.b16 %v135
    %v219 = vunpack.c.l.b16 %v136
    %v220 = vunpack.c.l.b16 %v137
    %v221 = vunpack.c.l.b16 %v138
    %v222 = vunpack.c.l.b16 %v139
    %v223 = vunpack.c.l.b16 %v140
    %v224 = vunpack.c.l.b16 %v141
    %v225 = vunpack.c.l.b16 %v142
    %v226 = vunpack.c.l.b16 %v143
    %v227 = vunpack.c.l.b16 %v144
    %v228 = vunpack.c.l.b16 %v145
    %v229 = vunpack.c.l.b16 %v146
    %v230 = vunpack.c.l.b16 %v147
    %v231 = vunpack.c.l.b16 %v148
    %v232 = vunpack.c.l.b16 %v149
    %v233 = vunpack.c.l.b16 %v150
    %v234 = vunpack.c.l.b16 %v151
    %v235 = vunpack.c.l.b16 %v152
    %v236 = vunpack.c.l.b16 %v153
    %v237 = vunpack.c.l.b16 %v154
    %v238 = vunpack.c.l.b16 %v155
    %v239 = vunpack.c.l.b16 %v156
    %v240 = vunpack.c.l.b16 %v157
    %v241 = vunpack.c.l.b16 %v158
    %v242 = vunpack.c.l.b16 %v159
    %v243 = vunpack.c.l.b16 %v160
    %v244 = vpack.c.b16 %v207, %v206
    %v245 = vpack.c.b16 %v209, %v208
    %v246 = vpack.c.b16 %v211, %v210
    %v247 = vpack.c.b16 %v213, %v212
    %v248 = vpack.c.b16 %v215, %v214
    %v249 = vpack.c.b16 %v217, %v216
    %v250 = vpack.c.b16 %v219, %v218
    %v251 = vpack.c.b16 %v221, %v220
    %v252 = vpack.c.b16 %v223, %v222
    %v253 = vpack.c.b16 %v225, %v224
    %v254 = vpack.c.b16 %v227, %v226
    %v255 = vpack.c.b16 %v229, %v228
    %v256 = vpack.c.b16 %v231, %v230
    %v257 = vpack.c.b16 %v233, %v232
    %v258 = vpack.c.b16 %v235, %v234
    %v259 = vpack.c.b16 %v237, %v236
    %v260 = vpack.c.b16 %v239, %v238
    %v261 = vpack.c.b16 %v241, %v240
    %v262 = vpack.c.b16 %v243, %v242
    %vm281 = vcmask 359424
    %v283 = vsel %vm281, %v101, 0
    %v286 = vsel %vm281, %v104, 0
    %v289 = vsel %vm281, %v107, 0
    %v292 = vsel %vm281, %v110, 0
    %v295 = vsel %vm281, %v113, 0
    %v298 = vsel %vm281, %v116, 0
    %v301 = vsel %vm281, %v119, 0
    %v304 = vsel %vm281, %v122, 0
    %vm306 = vcmask 1045504
    %v308 = vsel %vm306, %v262, 0
    %310 = vmatprep.subr.bf16.mxu0 0
    %311 = vmatpush1.bf16.msra.mxu0 %v251
    %312 = vmatprep.subr.bf16.mxu0 0
    %313 = vmatpush1.bf16.msra.mxu0 %v250
    %314 = vmatprep.subr.bf16.mxu0 0
    %315 = vmatpush1.bf16.msra.mxu0 %v249
    %316 = vmatprep.subr.bf16.mxu0 0
    %317 = vmatpush1.bf16.msra.mxu0 %v248
    %318 = vmatprep.subr.bf16.mxu0 0
    %319 = vmatpush1.bf16.msra.mxu0 %v247
    %320 = vmatprep.subr.bf16.mxu0 0
    %321 = vmatpush1.bf16.msra.mxu0 %v246
    %322 = vmatprep.subr.bf16.mxu0 0
    %323 = vmatpush1.bf16.msra.mxu0 %v245
    %324 = vmatprep.subr.bf16.mxu0 0
    %325 = vmatpush1.bf16.msra.mxu0 %v244
    %326 = vmatprep.subr.bf16.mxu0 0
    %327 = vmatpush2.bf16.msra.mxu0 %v259
    %328 = vmatprep.subr.bf16.mxu0 0
    %329 = vmatpush2.bf16.msra.mxu0 %v258
    %330 = vmatprep.subr.bf16.mxu0 0
    %331 = vmatpush2.bf16.msra.mxu0 %v257
    %332 = vmatprep.subr.bf16.mxu0 0
    %333 = vmatpush2.bf16.msra.mxu0 %v256
    %334 = vmatprep.subr.bf16.mxu0 0
    %335 = vmatpush2.bf16.msra.mxu0 %v255
    %336 = vmatprep.subr.bf16.mxu0 0
    %337 = vmatpush2.bf16.msra.mxu0 %v254
    %338 = vmatprep.subr.bf16.mxu0 0
    %339 = vmatpush2.bf16.msra.mxu0 %v253
    %340 = vmatprep.subr.bf16.mxu0 0
    %341 = vmatpush2.bf16.msra.mxu0 %v252
    %342 = vmatprep.mubr.bf16.mxu0 %v100
    %343 = vmatmul.mubr.bf16.gmra.mxu0 %v99
    %v344 = vpop.f32.mrf.mxu0
    %v345 = vadd.f32 %v166, %v344
    %v346 = vpop.f32.mrf.mxu0
    %v347 = vpop.f32.mrf.mxu0
    %v348 = vadd.f32 %v166, %v347
    %v349 = vpop.f32.mrf.mxu0
    %350 = vmatprep.mubr.bf16.mxu0 %v103
    %351 = vmatmul.mubr.bf16.gmra.mxu0 %v102
    %v352 = vpop.f32.mrf.mxu0
    %v353 = vadd.f32 %v166, %v352
    %v354 = vpop.f32.mrf.mxu0
    %v355 = vpop.f32.mrf.mxu0
    %v356 = vadd.f32 %v166, %v355
    %v357 = vpop.f32.mrf.mxu0
    %358 = vmatprep.mubr.bf16.mxu0 %v106
    %359 = vmatmul.mubr.bf16.gmra.mxu0 %v105
    %v360 = vpop.f32.mrf.mxu0
    %v361 = vadd.f32 %v166, %v360
    %v362 = vpop.f32.mrf.mxu0
    %v363 = vpop.f32.mrf.mxu0
    %v364 = vadd.f32 %v166, %v363
    %v365 = vpop.f32.mrf.mxu0
    %366 = vmatprep.mubr.bf16.mxu0 %v109
    %367 = vmatmul.mubr.bf16.gmra.mxu0 %v108
    %v368 = vpop.f32.mrf.mxu0
    %v369 = vadd.f32 %v166, %v368
    %v370 = vpop.f32.mrf.mxu0
    %v371 = vpop.f32.mrf.mxu0
    %v372 = vadd.f32 %v166, %v371
    %v373 = vpop.f32.mrf.mxu0
    %374 = vmatprep.mubr.bf16.mxu0 %v112
    %375 = vmatmul.mubr.bf16.gmra.mxu0 %v111
    %v376 = vpop.f32.mrf.mxu0
    %v377 = vadd.f32 %v166, %v376
    %v378 = vpop.f32.mrf.mxu0
    %v379 = vpop.f32.mrf.mxu0
    %v380 = vadd.f32 %v166, %v379
    %v381 = vpop.f32.mrf.mxu0
    %382 = vmatprep.mubr.bf16.mxu0 %v115
    %383 = vmatmul.mubr.bf16.gmra.mxu0 %v114
    %v384 = vpop.f32.mrf.mxu0
    %v385 = vadd.f32 %v166, %v384
    %v386 = vpop.f32.mrf.mxu0
    %v387 = vpop.f32.mrf.mxu0
    %v388 = vadd.f32 %v166, %v387
    %v389 = vpop.f32.mrf.mxu0
    %390 = vmatprep.mubr.bf16.mxu0 %v118
    %391 = vmatmul.mubr.bf16.gmra.mxu0 %v117
    %v392 = vpop.f32.mrf.mxu0
    %v393 = vadd.f32 %v166, %v392
    %v394 = vpop.f32.mrf.mxu0
    %v395 = vpop.f32.mrf.mxu0
    %v396 = vadd.f32 %v166, %v395
    %v397 = vpop.f32.mrf.mxu0
    %398 = vmatprep.mubr.bf16.mxu0 %v121
    %399 = vmatmul.mubr.bf16.gmra.mxu0 %v120
    %v400 = vpop.f32.mrf.mxu0
    %v401 = vadd.f32 %v166, %v400
    %v402 = vpop.f32.mrf.mxu0
    %v403 = vpop.f32.mrf.mxu0
    %v404 = vadd.f32 %v166, %v403
    %v405 = vpop.f32.mrf.mxu0
    %406 = vdwg.mxu0
    %407 = vmatprep.subr.bf16.mxu0 0
    %408 = vmatpush1.bf16.msra.mxu0 0
    %409 = vmatprep.subr.bf16.mxu0 0
    %410 = vmatpush1.bf16.msra.mxu0 0
    %411 = vmatprep.subr.bf16.mxu0 0
    %412 = vmatpush1.bf16.msra.mxu0 0
    %413 = vmatprep.subr.bf16.mxu0 0
    %414 = vmatpush1.bf16.msra.mxu0 0
    %415 = vmatprep.subr.bf16.mxu0 0
    %416 = vmatpush1.bf16.msra.mxu0 0
    %417 = vmatprep.subr.bf16.mxu0 0
    %418 = vmatpush1.bf16.msra.mxu0 %v308
    %419 = vmatprep.subr.bf16.mxu0 0
    %420 = vmatpush1.bf16.msra.mxu0 %v261
    %421 = vmatprep.subr.bf16.mxu0 0
    %422 = vmatpush1.bf16.msra.mxu0 %v260
    %423 = vmatprep.subr.bf16.mxu0 0
    %424 = vmatpush2.bf16.msra.mxu0 0
    %425 = vmatprep.subr.bf16.mxu0 0
    %426 = vmatpush2.bf16.msra.mxu0 0
    %427 = vmatprep.subr.bf16.mxu0 0
    %428 = vmatpush2.bf16.msra.mxu0 0
    %429 = vmatprep.subr.bf16.mxu0 0
    %430 = vmatpush2.bf16.msra.mxu0 0
    %431 = vmatprep.subr.bf16.mxu0 0
    %432 = vmatpush2.bf16.msra.mxu0 0
    %433 = vmatprep.subr.bf16.mxu0 0
    %434 = vmatpush2.bf16.msra.mxu0 0
    %435 = vmatprep.subr.bf16.mxu0 0
    %436 = vmatpush2.bf16.msra.mxu0 0
    %437 = vmatprep.subr.bf16.mxu0 0
    %438 = vmatpush2.bf16.msra.mxu0 0
    %439 = vmatprep.mubr.bf16.mxu0 0
    %440 = vmatmul.mubr.bf16.gmra.mxu0 %v283
    %v441 = vpop.f32.mrf.mxu0
    %v442 = vadd.f32 %v345, %v441
    %v443 = vpop.f32.mrf.mxu0
    %v444 = vpop.f32.mrf.mxu0
    %v445 = vadd.f32 %v348, %v444
    %v446 = vpop.f32.mrf.mxu0
    %447 = vmatprep.mubr.bf16.mxu0 0
    %448 = vmatmul.mubr.bf16.gmra.mxu0 %v286
    %v449 = vpop.f32.mrf.mxu0
    %v450 = vadd.f32 %v353, %v449
    %v451 = vpop.f32.mrf.mxu0
    %v452 = vpop.f32.mrf.mxu0
    %v453 = vadd.f32 %v356, %v452
    %v454 = vpop.f32.mrf.mxu0
    %455 = vmatprep.mubr.bf16.mxu0 0
    %456 = vmatmul.mubr.bf16.gmra.mxu0 %v289
    %v457 = vpop.f32.mrf.mxu0
    %v458 = vadd.f32 %v361, %v457
    %v459 = vpop.f32.mrf.mxu0
    %v460 = vpop.f32.mrf.mxu0
    %v461 = vadd.f32 %v364, %v460
    %v462 = vpop.f32.mrf.mxu0
    %463 = vmatprep.mubr.bf16.mxu0 0
    %464 = vmatmul.mubr.bf16.gmra.mxu0 %v292
    %v465 = vpop.f32.mrf.mxu0
    %v466 = vadd.f32 %v369, %v465
    %v467 = vpop.f32.mrf.mxu0
    %v468 = vpop.f32.mrf.mxu0
    %v469 = vadd.f32 %v372, %v468
    %v470 = vpop.f32.mrf.mxu0
    %471 = vmatprep.mubr.bf16.mxu0 0
    %472 = vmatmul.mubr.bf16.gmra.mxu0 %v295
    %v473 = vpop.f32.mrf.mxu0
    %v474 = vadd.f32 %v377, %v473
    %v475 = vpop.f32.mrf.mxu0
    %v476 = vpop.f32.mrf.mxu0
    %v477 = vadd.f32 %v380, %v476
    %v478 = vpop.f32.mrf.mxu0
    %479 = vmatprep.mubr.bf16.mxu0 0
    %480 = vmatmul.mubr.bf16.gmra.mxu0 %v298
    %v481 = vpop.f32.mrf.mxu0
    %v482 = vadd.f32 %v385, %v481
    %v483 = vpop.f32.mrf.mxu0
    %v484 = vpop.f32.mrf.mxu0
    %v485 = vadd.f32 %v388, %v484
    %v486 = vpop.f32.mrf.mxu0
    %487 = vmatprep.mubr.bf16.mxu0 0
    %488 = vmatmul.mubr.bf16.gmra.mxu0 %v301
    %v489 = vpop.f32.mrf.mxu0
    %v490 = vadd.f32 %v393, %v489
    %v491 = vpop.f32.mrf.mxu0
    %v492 = vpop.f32.mrf.mxu0
    %v493 = vadd.f32 %v396, %v492
    %v494 = vpop.f32.mrf.mxu0
    %495 = vmatprep.mubr.bf16.mxu0 0
    %496 = vmatmul.mubr.bf16.gmra.mxu0 %v304
    %v497 = vpop.f32.mrf.mxu0
    %v498 = vadd.f32 %v401, %v497
    %v499 = vpop.f32.mrf.mxu0
    %v500 = vpop.f32.mrf.mxu0
    %v501 = vadd.f32 %v404, %v500
    %v502 = vpop.f32.mrf.mxu0
    %503 = vdwg.mxu0
    %v504 = vmax.f32 %v442, 0.0
    %v505 = vmax.f32 %v445, 0.0
    %v506 = vmax.f32 %v450, 0.0
    %v507 = vmax.f32 %v453, 0.0
    %v508 = vmax.f32 %v458, 0.0
    %v509 = vmax.f32 %v461, 0.0
    %v510 = vmax.f32 %v466, 0.0
    %v511 = vmax.f32 %v469, 0.0
    %v512 = vmax.f32 %v474, 0.0
    %v513 = vmax.f32 %v477, 0.0
    %v514 = vmax.f32 %v482, 0.0
    %v515 = vmax.f32 %v485, 0.0
    %v516 = vmax.f32 %v490, 0.0
    %v517 = vmax.f32 %v493, 0.0
    %v518 = vmax.f32 %v498, 0.0
    %v519 = vmax.f32 %v501, 0.0
    %v520 = vld [vmem:[%s3] sm:$0x1]
    %s521 = sld [smem:[#allocation2]]
    %v522 = vstv %s521
    %523 = vmatprep.subr.mxu0 0.0
    %524 = vmatpush1.xpose.msra.mxu0 %v519
    %525 = vmatprep.subr.mxu0 0.0
    %526 = vmatpush1.xpose.msra.mxu0 %v518
    %527 = vmatprep.subr.mxu0 0.0
    %528 = vmatpush1.xpose.msra.mxu0 %v517
    %529 = vmatprep.subr.mxu0 0.0
    %530 = vmatpush1.xpose.msra.mxu0 %v516
    %531 = vmatprep.subr.mxu0 0.0
    %532 = vmatpush1.xpose.msra.mxu0 %v515
    %533 = vmatprep.subr.mxu0 0.0
    %534 = vmatpush1.xpose.msra.mxu0 %v514
    %535 = vmatprep.subr.mxu0 0.0
    %536 = vmatpush1.xpose.msra.mxu0 %v513
    %537 = vmatprep.subr.mxu0 0.0
    %538 = vmatpush1.xpose.msra.mxu0 %v512
    %539 = vmatprep.subr.mxu0 0.0
    %540 = vmatpush1.xpose.msra.mxu0 %v511
    %541 = vmatprep.subr.mxu0 0.0
    %542 = vmatpush1.xpose.msra.mxu0 %v510
    %543 = vmatprep.subr.mxu0 0.0
    %544 = vmatpush1.xpose.msra.mxu0 %v509
    %545 = vmatprep.subr.mxu0 0.0
    %546 = vmatpush1.xpose.msra.mxu0 %v508
    %547 = vmatprep.subr.mxu0 0.0
    %548 = vmatpush1.xpose.msra.mxu0 %v507
    %549 = vmatprep.subr.mxu0 0.0
    %550 = vmatpush1.xpose.msra.mxu0 %v506
    %551 = vmatprep.subr.mxu0 0.0
    %552 = vmatpush1.xpose.msra.mxu0 %v505
    %553 = vmatprep.subr.mxu0 0.0
    %554 = vmatpush1.xpose.msra.mxu0 %v504
    %555 = vmatprep.subr.mxu0 0.0
    %556 = vmatpush2.xpose.msra.mxu0 0.0
    %557 = vmatprep.subr.mxu0 0.0
    %558 = vmatpush2.xpose.msra.mxu0 0.0
    %559 = vmatprep.subr.mxu0 0.0
    %560 = vmatpush2.xpose.msra.mxu0 0.0
    %561 = vmatprep.subr.mxu0 0.0
    %562 = vmatpush2.xpose.msra.mxu0 0.0
    %563 = vmatprep.subr.mxu0 0.0
    %564 = vmatpush2.xpose.msra.mxu0 0.0
    %565 = vmatprep.subr.mxu0 0.0
    %566 = vmatpush2.xpose.msra.mxu0 0.0
    %567 = vmatprep.subr.mxu0 0.0
    %568 = vmatpush2.xpose.msra.mxu0 0.0
    %569 = vmatprep.subr.mxu0 0.0
    %570 = vmatpush2.xpose.msra.mxu0 0.0
    %571 = vmatprep.subr.mxu0 0.0
    %572 = vmatpush2.xpose.msra.mxu0 0.0
    %573 = vmatprep.subr.mxu0 0.0
    %574 = vmatpush2.xpose.msra.mxu0 0.0
    %575 = vmatprep.subr.mxu0 0.0
    %576 = vmatpush2.xpose.msra.mxu0 0.0
    %577 = vmatprep.subr.mxu0 0.0
    %578 = vmatpush2.xpose.msra.mxu0 0.0
    %579 = vmatprep.subr.mxu0 0.0
    %580 = vmatpush2.xpose.msra.mxu0 0.0
    %581 = vmatprep.subr.mxu0 0.0
    %582 = vmatpush2.xpose.msra.mxu0 0.0
    %583 = vmatprep.subr.mxu0 0.0
    %584 = vmatpush2.xpose.msra.mxu0 0.0
    %585 = vmatprep.subr.mxu0 0.0
    %586 = vmatpush2.xpose.msra.mxu0 0.0
    %587 = vmatprep.mubr.f32.mxu0 0.0
    %588 = vmatmul.mubr.f32.gmra.mxu0 %v520
    %v589 = vpop.f32.mrf.mxu0
    %v590 = vadd.f32 %v522, %v589
    %v591 = vpop.f32.mrf.mxu0
    %592 = vdwg.mxu0
    %593 = vst [vmem:[#allocation8] sm:$0x1] %v590
    // Predicated region
    $region30: #{tpu_custom_call.1} parent=1 // pred_check
      _
    $region31: #{tpu_custom_call.1} parent=1 // pred_check_branch
      %595 = sbr.rel (0) target = $region33
    $region32: #{tpu_custom_call.1} parent=1 // pred_region
      %s597 = ssub.s32 16, 16
      %598 = vsyncadd [#allocation5], %s597
      %s600 = sshll.u32 [#allocation8], 4
      %s601 = int_to_ptr.vmem [resolvable:$true] %s600
      %603 = dma.vmem_to_hbm [thread:$0]  %s601, 16, %s5, [#allocation5]
    $region33: #{tpu_custom_call.1} parent=1 // pred_fallthru
      _
    // Predicated region
    $region34: #{tpu_custom_call.1} parent=1 // pred_check
      _
    $region35: #{tpu_custom_call.1} parent=1 // pred_check_branch
      %605 = sbr.rel (0) target = $region37
    $region36: #{tpu_custom_call.1} parent=1 // pred_region
      %606 = dma.done [#allocation5], 16
    $region37: #{tpu_custom_call.1} parent=1 // pred_fallthru
      _
    %607 = vsyncpa [#allocation4], 1
    %608 = vsyncpa [#allocation7], 1
    %609 = vsyncpa [#allocation5], 1

</llo_original>
